<compile_context>
chip_gen: v5e
topology: v5e:2x2
jax: 0.10.0
libtpu: 0.0.40
codegen_flags: <defaults>
</compile_context>

<pallas_src>
import math
import functools

import jax
import jax.numpy as jnp
from jax import lax
from jax.experimental import pallas as pl
from jax.experimental.pallas import tpu as pltpu


# ----------------------------------------------------------------------------
# Parameter setup (mirrors PositionalEncoding.__init__)
# ----------------------------------------------------------------------------
def make_pe_table(lookback: int, d_model: int) -> jnp.ndarray:
    position = jnp.arange(lookback, dtype=jnp.float32)[:, None]               # (L, 1)
    div_term = jnp.exp(
        jnp.arange(0, d_model, 2, dtype=jnp.float32) * (-math.log(10000.0) / d_model)
    )                                                                          # (ceil(D/2),)
    sin_part = jnp.sin(position * div_term)
    cos_part = jnp.cos(position * div_term)
    pe = jnp.zeros((lookback, d_model), dtype=jnp.float32)
    pe = pe.at[:, 0::2].set(sin_part)
    pe = pe.at[:, 1::2].set(cos_part[:, : d_model // 2])
    # pe.unsqueeze(0).transpose(0, 1) -> (lookback, 1, d_model)
    return pe[:, None, :]


# ----------------------------------------------------------------------------
# In-kernel helpers
# ----------------------------------------------------------------------------
def _hash_u32(x):
    """lowbias32-style integer mix; uniform-enough u32 bits for dropout."""
    x = x ^ (x >> jnp.uint32(16))
    x = x * jnp.uint32(0x7FEB352D)
    x = x ^ (x >> jnp.uint32(15))
    x = x * jnp.uint32(0x846CA68B)
    x = x ^ (x >> jnp.uint32(16))
    return x


def _pe_tile(pe_ref, tile_s):
    """Slice the (possibly VMEM-resident) pe table down to this S-tile."""
    if pe_ref.shape[0] == tile_s:          # pe tiled the same as x (or grid == 1)
        return pe_ref[...]
    row0 = pl.program_id(0) * tile_s       # pe fully resident: dynamic leading slice
    return pe_ref[pl.ds(row0, tile_s), :, :]


# ----------------------------------------------------------------------------
# Kernels
# ----------------------------------------------------------------------------
def pe_add_kernel(x_ref, pe_ref, o_ref):
    tile_s = x_ref.shape[0]
    o_ref[...] = (x_ref[...] + _pe_tile(pe_ref, tile_s)).astype(o_ref.dtype)


def pe_add_dropout_kernel(seed_ref, x_ref, pe_ref, o_ref, *,
                          keep_threshold: int, inv_keep: float):
    # Training-mode dropout: drop with prob p, scale survivors by 1/(1-p).
    # RNG stream differs from torch's, as expected for a synthetic kernel.
    tile_s, B, D = x_ref.shape
    y = x_ref[...] + _pe_tile(pe_ref, tile_s)

    row0 = pl.program_id(0) * tile_s
    shp = (tile_s, B, D)
    row_u = (lax.broadcasted_iota(jnp.int32, shp, 0) + row0).astype(jnp.uint32)
    b_i = lax.broadcasted_iota(jnp.uint32, shp, 1)
    d_i = lax.broadcasted_iota(jnp.uint32, shp, 2)
    gid = (row_u * jnp.uint32(B) + b_i) * jnp.uint32(D) + d_i       # global element id

    seed_u = seed_ref[0].astype(jnp.uint32)
    bits = _hash_u32(gid * jnp.uint32(0x9E3779B1) + seed_u * jnp.uint32(0x85EBCA6B))

    keep = bits >= jnp.uint32(keep_threshold)                       # P(keep) = 1 - p
    o_ref[...] = jnp.where(keep, y * jnp.float32(inv_keep),
                           jnp.zeros_like(y)).astype(o_ref.dtype)


# ----------------------------------------------------------------------------
# Wrapper
# ----------------------------------------------------------------------------
def _pick_tile_s(S: int, B: int, D: int, budget_bytes: int = 2 << 20) -> int:
    """Largest divisor of S whose x-block fits a ~2 MiB VMEM budget."""
    per_row = B * D * 4
    t = max(1, min(S, budget_bytes // max(per_row, 1)))
    while S % t:
        t -= 1
    return t


def positional_encoding_forward(x, pe, *, p: float = 0.1, training: bool = False,
                                seed: int = 0, step: int = 0):
    """x: (S, B, D) float32; pe: (L, 1, D) with L >= S."""
    S, B, D = x.shape
    pe_sliced = pe[:S]                                  # pe[:x.size(0), :]
    tile_s = _pick_tile_s(S, B, D)
    grid = (S // tile_s,)

    x_spec = pl.BlockSpec((tile_s, B, D), lambda i, *_: (i, 0, 0))
    o_spec = pl.BlockSpec((tile_s, B, D), lambda i, *_: (i, 0, 0))

    # Keep pe resident in VMEM when its padded footprint is small; otherwise
    # stream it with the same S-tiling as x.
    pe_padded_bytes = S * 8 * ((D + 127) // 128) * 128 * 4
    if pe_padded_bytes <= (4 << 20):
        pe_spec = pl.BlockSpec((S, 1, D), lambda i, *_: (0, 0, 0))       # resident
    else:
        pe_spec = pl.BlockSpec((tile_s, 1, D), lambda i, *_: (i, 0, 0))  # per-step

    out_shape = jax.ShapeDtypeStruct((S, B, D), x.dtype)
    cparams = pltpu.CompilerParams(dimension_semantics=("parallel",))

    if (not training) or p == 0.0:
        return pl.pallas_call(
            pe_add_kernel,
            out_shape=out_shape,
            grid_spec=pltpu.PrefetchScalarGridSpec(
                num_scalar_prefetch=0, grid=grid,
                in_specs=[x_spec, pe_spec], out_specs=o_spec),
            compiler_params=cparams,
        )(x, pe_sliced)

    # Fold a step counter into the seed so repeated calls get fresh masks.
    seed_arr = jnp.array([(int(seed) + int(step) * 1000003) & 0x7FFFFFFF],
                         dtype=jnp.int32)
    keep_threshold = min(int(round(float(p) * (1 << 32))), (1 << 32) - 1)
    inv_keep = 1.0 / (1.0 - float(p))

    return pl.pallas_call(
        functools.partial(pe_add_dropout_kernel,
                          keep_threshold=keep_threshold, inv_keep=inv_keep),
        out_shape=out_shape,
        grid_spec=pltpu.PrefetchScalarGridSpec(
            num_scalar_prefetch=1,                      # seed lands in SMEM
            grid=grid,
            in_specs=[x_spec, pe_spec], out_specs=o_spec),
        compiler_params=cparams,
    )(seed_arr, x, pe_sliced)


# ----------------------------------------------------------------------------
# Demo / check
# ----------------------------------------------------------------------------
if __name__ == "__main__":
    lookback = 16     # pe table length
    seq = 8           # x.size(0) <= lookback
    batch = 2
    d_model = 32
    p_drop = 0.1

    key = jax.random.PRNGKey(0)
    x = jax.random.normal(key, (seq, batch, d_model), dtype=jnp.float32)
    pe = make_pe_table(lookback, d_model)
    ref = x + pe[:seq]

    # Eval mode (dropout is identity) -- exact semantics check.
    out_eval = jax.block_until_ready(
        positional_encoding_forward(x, pe, p=p_drop, training=False))
    assert out_eval.shape == (seq, batch, d_model)
    assert jnp.allclose(out_eval, ref, atol=1e-6), "eval-mode mismatch"

    # Training mode (dropout active) -- exercise the hash-PRNG dropout path.
    out_train = jax.block_until_ready(
        positional_encoding_forward(x, pe, p=p_drop, training=True, seed=123, step=7))
    assert out_train.shape == (seq, batch, d_model)
    assert bool(jnp.all(jnp.isfinite(out_train)))
    kept = out_train != 0
    assert bool(jnp.any(kept))
    # dropped positions are exactly zero; kept positions are ref/(1-p)
    inv = 1.0 / (1.0 - p_drop)
    assert jnp.allclose(jnp.where(kept, out_train, 0.0),
                        jnp.where(kept, ref * inv, 0.0), atol=1e-5)

    print("KERNEL_OK")
</pallas_src>

<mosaic_0001>
module attributes {stable_mosaic.version = 11 : i64} {
  func.func @pe_add_kernel(%arg0: i32, %arg1: memref<8x2x32xf32, #tpu.memory_space<vmem>>, %arg2: memref<8x1x32xf32, #tpu.memory_space<vmem>>, %arg3: memref<8x2x32xf32, #tpu.memory_space<vmem>>) attributes {dimension_semantics = [#tpu.dimension_semantics<parallel>], iteration_bounds = array<i64: 1>, scalar_prefetch = 0 : i64, scratch_operands = 0 : i64, tpu.core_type = #tpu.core_type<tc>, window_params = [{transform_indices = @transform_0, window_bounds = array<i64: 8, 2, 32>}, {pipeline_mode = #tpu.pipeline_mode<synchronous>, transform_indices = @transform_1, window_bounds = array<i64: 8, 1, 32>}, {transform_indices = @transform_2, window_bounds = array<i64: 8, 2, 32>}]} {
    %c0 = arith.constant 0 : index
    %c0_0 = arith.constant 0 : index
    %c0_1 = arith.constant 0 : index
    %0 = vector.load %arg1[%c0, %c0_0, %c0_1] : memref<8x2x32xf32, #tpu.memory_space<vmem>>, vector<8x2x32xf32>
    %c0_2 = arith.constant 0 : index
    %c0_3 = arith.constant 0 : index
    %c0_4 = arith.constant 0 : index
    %1 = vector.load %arg2[%c0_2, %c0_3, %c0_4] : memref<8x1x32xf32, #tpu.memory_space<vmem>>, vector<8x1x32xf32>
    %2 = vector.broadcast %1 : vector<8x1x32xf32> to vector<8x2x32xf32>
    %3 = arith.addf %0, %2 : vector<8x2x32xf32>
    %c0_5 = arith.constant 0 : index
    %c0_6 = arith.constant 0 : index
    %c0_7 = arith.constant 0 : index
    %4 = vector.load %arg3[%c0_5, %c0_6, %c0_7] : memref<8x2x32xf32, #tpu.memory_space<vmem>>, vector<8x2x32xf32>
    tpu.vector_store %arg3[%c0_5, %c0_6, %c0_7], %3 {strides = array<i32>} : memref<8x2x32xf32, #tpu.memory_space<vmem>>, vector<8x2x32xf32>,
    return
  }
  func.func @transform_0(%arg0: i32) -> (i32, i32, i32) {
    %c0_i32 = arith.constant 0 : i32
    %c0_i32_0 = arith.constant 0 : i32
    %c0_i32_1 = arith.constant 0 : i32
    return %arg0, %c0_i32, %c0_i32_0 : i32, i32, i32
  }
  func.func @transform_1(%arg0: i32) -> (i32, i32, i32) {
    %c0_i32 = arith.constant 0 : i32
    %c0_i32_0 = arith.constant 0 : i32
    %c0_i32_1 = arith.constant 0 : i32
    %c0_i32_2 = arith.constant 0 : i32
    return %c0_i32, %c0_i32_0, %c0_i32_1 : i32, i32, i32
  }
  func.func @transform_2(%arg0: i32) -> (i32, i32, i32) {
    %c0_i32 = arith.constant 0 : i32
    %c0_i32_0 = arith.constant 0 : i32
    %c0_i32_1 = arith.constant 0 : i32
    return %arg0, %c0_i32, %c0_i32_0 : i32, i32, i32
  }
}

</mosaic_0001>

<llo_original>
// kernel: tpu_custom_call.1
$region0: #{tpu_custom_call.1}
  #allocation0 [shape = 'u32[]', space=smem, size = 0x4, offset = 0x4, fixed_abs, tag = 'smem constant byte address 0x4 - core index']
  #allocation1 [shape = 'u32[72,128]{1,0:T(1,128)}', space=vmem, size = 0x9000, scoped, tag = 'internal scratch']
  %s0 = inlined_call_operand.hbm [shape: f32[8,2,32], index: 0, kind: input, shape index: {}]
  %s1 = inlined_call_operand.hbm [shape: f32[8,1,32], index: 1, kind: input, shape index: {}]
  %s2 = inlined_call_operand.hbm [shape: f32[8,2,32], index: 2, kind: output, shape index: {}]
  %s3 = sld [smem:[#allocation0]]
  $region26: #{tpu_custom_call.1} parent=0
    _
  %s5 = ssub.s32 1, %s3
  %s6 = scalar_select 0, %s5, %s3
  $region1: #{tpu_custom_call.1} parent=0
    #allocation2 [shape = 'u8[8192]{0}', space=vmem, size = 0x2000, scoped, tag = 'input window, operand 0, single buffered']
    #allocation3 [shape = 's32[1]{0}', space=sflag, size = 0x4, scoped, tag = 'scoped memory for tpu_custom_call.1']
    #allocation4 [shape = 's32[1]{0}', space=sflag, size = 0x4, scoped, tag = 'scoped memory for tpu_custom_call.1']
    #allocation5 [shape = 'u8[4096]{0}', space=vmem, size = 0x1000, scoped, tag = 'input window, operand 1, single buffered']
    #allocation6 [shape = 's32[1]{0}', space=sflag, size = 0x4, scoped, tag = 'scoped memory for tpu_custom_call.1']
    #allocation7 [shape = 'u8[8192]{0}', space=vmem, size = 0x2000, scoped, tag = 'output window, operand 0, single buffered']
    %7 = vsyncpa [#allocation3], 0
    %8 = vsyncpa [#allocation6], 0
    %9 = vsyncpa [#allocation4], 0
    // Predicated region
    $region2: #{tpu_custom_call.1} parent=1 // pred_check
      _
    $region3: #{tpu_custom_call.1} parent=1 // pred_check_branch
      %11 = sbr.rel (0) target = $region5
    $region4: #{tpu_custom_call.1} parent=1 // pred_region
      %13 = vsyncadd [#allocation3], 0
      %s14 = sshll.u32 %s0, 4
      %s15 = int_to_ptr.hbm [resolvable:$true] %s14
      %s16 = sshll.u32 [#allocation2], 4
      %s17 = int_to_ptr.vmem [resolvable:$true] %s16
      %22 = dma.hbm_to_vmem [thread:$0]  %s15, 256, %s17, [#allocation3], 32, 32, 2
    $region5: #{tpu_custom_call.1} parent=1 // pred_fallthru
      _
    // Predicated region
    $region6: #{tpu_custom_call.1} parent=1 // pred_check
      _
    $region7: #{tpu_custom_call.1} parent=1 // pred_check_branch
      %24 = sbr.rel (0) target = $region9
    $region8: #{tpu_custom_call.1} parent=1 // pred_region
      %26 = vsyncadd [#allocation6], 0
      %s27 = sshll.u32 %s1, 4
      %s28 = int_to_ptr.hbm [resolvable:$true] %s27
      %s29 = sshll.u32 [#allocation5], 4
      %s30 = int_to_ptr.vmem [resolvable:$true] %s29
      %35 = dma.hbm_to_vmem [thread:$0]  %s28, 128, %s30, [#allocation6], 16, 16, 1
    $region9: #{tpu_custom_call.1} parent=1 // pred_fallthru
      _
    // Predicated region
    $region10: #{tpu_custom_call.1} parent=1 // pred_check
      _
    $region11: #{tpu_custom_call.1} parent=1 // pred_check_branch
      %37 = sbr.rel (0) target = $region13
    $region12: #{tpu_custom_call.1} parent=1 // pred_region
      %39 = dma.done [#allocation3], 256
    $region13: #{tpu_custom_call.1} parent=1 // pred_fallthru
      _
    // Predicated region
    $region14: #{tpu_custom_call.1} parent=1 // pred_check
      _
    $region15: #{tpu_custom_call.1} parent=1 // pred_check_branch
      %41 = sbr.rel (0) target = $region17
    $region16: #{tpu_custom_call.1} parent=1 // pred_region
      %43 = dma.done [#allocation6], 128
    $region17: #{tpu_custom_call.1} parent=1 // pred_fallthru
      _
    %v44 = vld [vmem:[#allocation2] sm:$0x3]
    %v45 = vld [vmem:[#allocation2 + $0x2] sm:$0x3]
    %v46 = vld [vmem:[#allocation2 + $0x4] sm:$0x3]
    %v47 = vld [vmem:[#allocation2 + $0x6] sm:$0x3]
    %v48 = vld [vmem:[#allocation2 + $0x8] sm:$0x3]
    %v49 = vld [vmem:[#allocation2 + $0xa] sm:$0x3]
    %v50 = vld [vmem:[#allocation2 + $0xc] sm:$0x3]
    %v51 = vld [vmem:[#allocation2 + $0xe] sm:$0x3]
    %v52 = vld [vmem:[#allocation5] sm:$0x1]
    %v53 = vld [vmem:[#allocation5 + $0x1] sm:$0x1]
    %v54 = vld [vmem:[#allocation5 + $0x2] sm:$0x1]
    %v55 = vld [vmem:[#allocation5 + $0x3] sm:$0x1]
    %v56 = vld [vmem:[#allocation5 + $0x4] sm:$0x1]
    %v57 = vld [vmem:[#allocation5 + $0x5] sm:$0x1]
    %v58 = vld [vmem:[#allocation5 + $0x6] sm:$0x1]
    %v59 = vld [vmem:[#allocation5 + $0x7] sm:$0x1]
    %v68 = vperm.slane %v52, 0
    %v69 = vperm.slane %v53, 0
    %v70 = vperm.slane %v54, 0
    %v71 = vperm.slane %v55, 0
    %v72 = vperm.slane %v56, 0
    %v73 = vperm.slane %v57, 0
    %v74 = vperm.slane %v58, 0
    %v75 = vperm.slane %v59, 0
    %v84 = vadd.f32 %v44, %v68
    %v85 = vadd.f32 %v45, %v69
    %v86 = vadd.f32 %v46, %v70
    %v87 = vadd.f32 %v47, %v71
    %v88 = vadd.f32 %v48, %v72
    %v89 = vadd.f32 %v49, %v73
    %v90 = vadd.f32 %v50, %v74
    %v91 = vadd.f32 %v51, %v75
    %vm92 = vcmask 254976
    %93 = vst.msk [vmem:[#allocation7] sm:$0x3] %vm92, %v84
    %94 = vst.msk [vmem:[#allocation7 + $0x2] sm:$0x3] %vm92, %v85
    %95 = vst.msk [vmem:[#allocation7 + $0x4] sm:$0x3] %vm92, %v86
    %96 = vst.msk [vmem:[#allocation7 + $0x6] sm:$0x3] %vm92, %v87
    %97 = vst.msk [vmem:[#allocation7 + $0x8] sm:$0x3] %vm92, %v88
    %98 = vst.msk [vmem:[#allocation7 + $0xa] sm:$0x3] %vm92, %v89
    %99 = vst.msk [vmem:[#allocation7 + $0xc] sm:$0x3] %vm92, %v90
    %100 = vst.msk [vmem:[#allocation7 + $0xe] sm:$0x3] %vm92, %v91
    // Predicated region
    $region18: #{tpu_custom_call.1} parent=1 // pred_check
      _
    $region19: #{tpu_custom_call.1} parent=1 // pred_check_branch
      %102 = sbr.rel (0) target = $region21
    $region20: #{tpu_custom_call.1} parent=1 // pred_region
      %104 = vsyncadd [#allocation4], 0
      %s105 = sshll.u32 [#allocation7], 4
      %s106 = int_to_ptr.vmem [resolvable:$true] %s105
      %s107 = sshll.u32 %s2, 4
      %s108 = int_to_ptr.hbm [resolvable:$true] %s107
      %113 = dma.vmem_to_hbm [thread:$0]  %s106, 256, %s108, [#allocation4], 32, 32, 2
    $region21: #{tpu_custom_call.1} parent=1 // pred_fallthru
      _
    // Predicated region
    $region22: #{tpu_custom_call.1} parent=1 // pred_check
      _
    $region23: #{tpu_custom_call.1} parent=1 // pred_check_branch
      %115 = sbr.rel (0) target = $region25
    $region24: #{tpu_custom_call.1} parent=1 // pred_region
      %117 = dma.done [#allocation4], 256
    $region25: #{tpu_custom_call.1} parent=1 // pred_fallthru
      _
    %118 = vsyncpa [#allocation3], 1
    %119 = vsyncpa [#allocation6], 1
    %120 = vsyncpa [#allocation4], 1

</llo_original>
